<compile_context>
chip_gen: v6e
topology: v6e:2x2x1
jax: 0.10.0
libtpu: 0.0.40
codegen_flags: <defaults>
</compile_context>

<pallas_src>
import jax
import jax.numpy as jnp
from jax import lax
from jax.experimental import pallas as pl
from jax.experimental.pallas import tpu as pltpu


def message_norm_kernel(scale_ref, x_ref, msg_ref, o_ref):
    # Upcast once for the reductions (accurate accumulation for any in dtype).
    xf = x_ref[...].astype(jnp.float32)
    mf = msg_ref[...].astype(jnp.float32)

    # Row-wise squared L2 norms: (tile_n, 1) columns (lane reductions -> XLU).
    sum_x2 = jnp.sum(xf * xf, axis=-1, keepdims=True)
    sum_m2 = jnp.sum(mf * mf, axis=-1, keepdims=True)

    # sqrt / rsqrt on the narrow column go to the EUP (free VLIW slot).
    # max(sum, 1e-24) == max(sqrt(sum), 1e-12) since sqrt is monotone, which
    # matches F.normalize's eps semantics exactly.
    x_norm = jnp.sqrt(sum_x2)
    msg_inv = lax.rsqrt(jnp.maximum(sum_m2, jnp.float32(1e-24)))
    factor = x_norm * msg_inv * scale_ref[0]

    out_dtype = jnp.dtype(o_ref.dtype)
    if jnp.issubdtype(out_dtype, jnp.floating) and out_dtype.itemsize == 2:
        # bf16/f16: do the only full-width multiply in the narrow dtype so no
        # full-width f32 copy of the msg tile stays live for it.  Rounding
        # differs by <= 1 narrow ulp vs f32-multiply-then-cast.  (On v5e,
        # which lacks a bf16 VALU, Mosaic upcasts internally.)
        o_ref[...] = msg_ref[...] * factor.astype(out_dtype)
    else:
        o_ref[...] = (mf * factor).astype(out_dtype)


# VMEM budgeting: keep the per-step footprint comfortably under the scoped
# limit we request.  v7x has only 64 MiB physical VMEM per TC (32 MiB scoped
# default); v5e's scoped default is 16 MiB, hence the explicit limit.
_VMEM_LIMIT_BYTES = 40 << 20
_VMEM_TILE_BUDGET = 28 << 20
# Target bytes of each INPUT streamed per grid step (2-4 MiB sits on the
# measured HBM-roofline plateau; amortizes the ~0.35 us fixed step cost).
_TARGET_STEP_BYTES = 3 << 20


def _align_down(v, a):
    return max(a, (v // a) * a)


def _align_up(v, a):
    return -(-v // a) * a


def _pick_tile_n(N, D, in_itemsize):
    """Row-tile size: byte-targeted (~3 MiB/input/step), VMEM-budgeted
    (pipelined tiles + f32 reduction intermediates), sublane aligned, and
    nudged to an even step count when the grid is short (v7x megacore)."""
    sublane = max(8, 32 // in_itemsize)   # 8 for f32, 16 for bf16

    # Bytes per tile row resident in VMEM:
    #   double-buffered x, msg, out tiles (input dtype)
    #   + full-width f32 intermediates (xf, mf) used by the reductions.
    row_bytes = 2 * 3 * D * in_itemsize + 2 * D * 4
    max_rows_vmem = max(sublane, _VMEM_TILE_BUDGET // row_bytes)

    # Bandwidth target: ~_TARGET_STEP_BYTES of each input per step.
    target_rows = max(sublane, _TARGET_STEP_BYTES // (D * in_itemsize))

    tile = min(N, target_rows, max_rows_vmem)
    if tile >= N:
        return N                          # single block covers all rows
    tile = _align_down(tile, sublane)     # (8,128) block-shape constraint

    # v7x shards the "parallel" grid axis across two TensorCores: a small odd
    # step count (e.g. 3) strands one core for part of the time.  Nudge the
    # tile so the count becomes even when that is cheap; harmless on the
    # single-core v5e/v6e (tiles stay large).
    steps = -(-N // tile)
    if steps > 1 and steps % 2 == 1:
        cand = _align_up(-(-N // (steps + 1)), sublane)
        if cand <= max_rows_vmem and (-(-N // cand)) % 2 == 0:
            tile = cand
    return tile


def message_norm(x, msg, scale, *, tile_n=None):
    """x: [N, D], msg: [N, D], scale: [1] -> [N, D].

    D is taken as one full lane block; multiples of 128 (typical GNN hidden
    dims 128/256) store lane-dense.
    """
    # TODO(synk): for D < 128 (e.g. D=64), pack 128//D rows per 128-lane block
    # to avoid masked vst.msk partial stores on the output path.
    N, D = x.shape
    assert msg.shape == (N, D)
    itemsize = jnp.dtype(x.dtype).itemsize
    if tile_n is None:
        tile_n = _pick_tile_n(N, D, itemsize)

    grid = (pl.cdiv(N, tile_n),)

    cost = pl.CostEstimate(
        flops=4 * N * D,                       # two squared-sum reductions + multiply
        transcendentals=2 * N,                 # sqrt + rsqrt per row
        bytes_accessed=3 * N * D * itemsize + 4,
    )

    return pl.pallas_call(
        message_norm_kernel,
        out_shape=jax.ShapeDtypeStruct((N, D), x.dtype),
        grid=grid,
        in_specs=[
            pl.BlockSpec(memory_space=pltpu.MemorySpace.SMEM),  # scale (1,)
            pl.BlockSpec((tile_n, D), lambda i: (i, 0)),        # x
            pl.BlockSpec((tile_n, D), lambda i: (i, 0)),        # msg
        ],
        out_specs=pl.BlockSpec((tile_n, D), lambda i: (i, 0)),
        compiler_params=pltpu.CompilerParams(
            dimension_semantics=("parallel",),
            vmem_limit_bytes=_VMEM_LIMIT_BYTES,
        ),
        cost_estimate=cost,
    )(scale, x, msg)


def _reference(x, msg, scale):
    msg_norm = jnp.linalg.norm(msg, axis=-1, keepdims=True)
    x_norm = jnp.linalg.norm(x, axis=-1, keepdims=True)
    return (msg / jnp.maximum(msg_norm, 1e-12)) * x_norm * scale[0]


if __name__ == "__main__":
    # Deterministic parameter init (MessageNorm.__init__: scale = [1.0]).
    scale = jnp.array([1.0], dtype=jnp.float32)

    key = jax.random.PRNGKey(0)
    kx, km = jax.random.split(key)

    # --- Check 1: f32, auto tile (single block). ---
    N, D = 256, 128
    x = jax.random.normal(kx, (N, D), dtype=jnp.float32)
    msg = jax.random.normal(km, (N, D), dtype=jnp.float32)
    out = jax.block_until_ready(message_norm(x, msg, scale))
    assert jnp.allclose(out, _reference(x, msg, scale), atol=1e-5, rtol=1e-5)

    # --- Check 2: f32, forced small tile -> multi-step grid + partial tile. ---
    N2 = 200
    x2 = jax.random.normal(kx, (N2, D), dtype=jnp.float32)
    msg2 = jax.random.normal(km, (N2, D), dtype=jnp.float32)
    out2 = jax.block_until_ready(message_norm(x2, msg2, scale, tile_n=64))
    assert jnp.allclose(out2, _reference(x2, msg2, scale), atol=1e-5, rtol=1e-5)

    # --- Check 3: bf16 inputs (narrow-dtype final multiply path). ---
    xb = x.astype(jnp.bfloat16)
    mb = msg.astype(jnp.bfloat16)
    outb = jax.block_until_ready(message_norm(xb, mb, scale))
    refb = _reference(xb.astype(jnp.float32), mb.astype(jnp.float32), scale)
    assert jnp.allclose(outb.astype(jnp.float32), refb, atol=5e-2, rtol=5e-2)

    print("KERNEL_OK")
</pallas_src>

<mosaic_0001>
module attributes {stable_mosaic.version = 11 : i64} {
  func.func @message_norm_kernel(%arg0: i32, %arg1: memref<1xf32, #tpu.memory_space<smem>>, %arg2: memref<256x128xf32, #tpu.memory_space<vmem>>, %arg3: memref<256x128xf32, #tpu.memory_space<vmem>>, %arg4: memref<256x128xf32, #tpu.memory_space<vmem>>) attributes {dimension_semantics = [#tpu.dimension_semantics<parallel>], iteration_bounds = array<i64: 1>, scalar_prefetch = 0 : i64, scratch_operands = 0 : i64, tpu.core_type = #tpu.core_type<tc>, window_params = [{transform_indices = @transform_0, window_bounds = array<i64: 1>}, {transform_indices = @transform_1, window_bounds = array<i64: 256, 128>}, {transform_indices = @transform_2, window_bounds = array<i64: 256, 128>}, {transform_indices = @transform_3, window_bounds = array<i64: 256, 128>}]} {
    %c0 = arith.constant 0 : index
    %c0_0 = arith.constant 0 : index
    %0 = vector.load %arg2[%c0, %c0_0] : memref<256x128xf32, #tpu.memory_space<vmem>>, vector<256x128xf32>
    %c0_1 = arith.constant 0 : index
    %c0_2 = arith.constant 0 : index
    %1 = vector.load %arg3[%c0_1, %c0_2] : memref<256x128xf32, #tpu.memory_space<vmem>>, vector<256x128xf32>
    %2 = arith.mulf %0, %0 : vector<256x128xf32>
    %cst = arith.constant dense<0.000000e+00> : vector<256xf32>
    %3 = vector.multi_reduction <add>, %2, %cst [1] : vector<256x128xf32> to vector<256xf32>
    %4 = vector.shape_cast %3 : vector<256xf32> to vector<256x1xf32>
    %5 = arith.mulf %1, %1 : vector<256x128xf32>
    %cst_3 = arith.constant dense<0.000000e+00> : vector<256xf32>
    %6 = vector.multi_reduction <add>, %5, %cst_3 [1] : vector<256x128xf32> to vector<256xf32>
    %7 = vector.shape_cast %6 : vector<256xf32> to vector<256x1xf32>
    %8 = math.sqrt %4 : vector<256x1xf32>
    %cst_4 = arith.constant 1.000000e-24 : f32
    %9 = vector.broadcast %cst_4 : f32 to vector<256x1xf32>
    %10 = arith.maximumf %7, %9 : vector<256x1xf32>
    %11 = math.rsqrt %10 : vector<256x1xf32>
    %12 = arith.mulf %8, %11 : vector<256x1xf32>
    %c0_5 = arith.constant 0 : index
    %13 = memref.load %arg1[%c0_5] : memref<1xf32, #tpu.memory_space<smem>>
    %14 = vector.broadcast %13 : f32 to vector<256x1xf32>
    %15 = arith.mulf %12, %14 : vector<256x1xf32>
    %16 = vector.broadcast %15 : vector<256x1xf32> to vector<256x128xf32>
    %17 = arith.mulf %1, %16 : vector<256x128xf32>
    %c0_6 = arith.constant 0 : index
    %c0_7 = arith.constant 0 : index
    %18 = vector.load %arg4[%c0_6, %c0_7] : memref<256x128xf32, #tpu.memory_space<vmem>>, vector<256x128xf32>
    tpu.vector_store %arg4[%c0_6, %c0_7], %17 {strides = array<i32>} : memref<256x128xf32, #tpu.memory_space<vmem>>, vector<256x128xf32>,
    return
  }
  func.func @transform_0(%arg0: i32) -> i32 {
    %c0_i32 = arith.constant 0 : i32
    %c0_i32_0 = arith.constant 0 : i32
    return %c0_i32 : i32
  }
  func.func @transform_1(%arg0: i32) -> (i32, i32) {
    %c0_i32 = arith.constant 0 : i32
    %c0_i32_0 = arith.constant 0 : i32
    return %arg0, %c0_i32 : i32, i32
  }
  func.func @transform_2(%arg0: i32) -> (i32, i32) {
    %c0_i32 = arith.constant 0 : i32
    %c0_i32_0 = arith.constant 0 : i32
    return %arg0, %c0_i32 : i32, i32
  }
  func.func @transform_3(%arg0: i32) -> (i32, i32) {
    %c0_i32 = arith.constant 0 : i32
    %c0_i32_0 = arith.constant 0 : i32
    return %arg0, %c0_i32 : i32, i32
  }
}

</mosaic_0001>

<llo_original>
// kernel: tpu_custom_call.1
$region0: #{tpu_custom_call.1}
  #allocation0 [shape = 'u32[]', space=smem, size = 0x4, offset = 0x4, fixed_abs, tag = 'smem constant byte address 0x4 - core index']
  #allocation1 [shape = 'u32[144,128]{1,0:T(1,128)}', space=vmem, size = 0x12000, scoped, tag = 'internal scratch']
  #allocation2 [shape = 'f32[1]{0:T(128)S(6)}', space=smem, size = 0x200, scoped, tag = 'scoped memory for tpu_custom_call.1']
  %s0 = inlined_call_operand.<no memory space> [shape: f32[1], index: 0, kind: input, shape index: {}]
  %s1 = inlined_call_operand.hbm [shape: f32[256,128], index: 1, kind: input, shape index: {}]
  %s2 = inlined_call_operand.hbm [shape: f32[256,128], index: 2, kind: input, shape index: {}]
  %s3 = inlined_call_operand.hbm [shape: f32[256,128], index: 3, kind: output, shape index: {}]
  %s4 = sld [smem:[#allocation0]]
  $region30: #{tpu_custom_call.1} parent=0
    _
  %s6 = ssub.s32 1, %s4
  %s7 = scalar_select 0, %s6, %s4
  %8 = sst [smem:[#allocation2]] %s0
  $region1: #{tpu_custom_call.1} parent=0
    #allocation3 [shape = 'u8[131072]{0}', space=vmem, size = 0x20000, scoped, tag = 'input window, operand 1, single buffered']
    #allocation4 [shape = 's32[1]{0}', space=sflag, size = 0x4, scoped, tag = 'scoped memory for tpu_custom_call.1']
    #allocation5 [shape = 's32[1]{0}', space=sflag, size = 0x4, scoped, tag = 'scoped memory for tpu_custom_call.1']
    #allocation6 [shape = 'u8[131072]{0}', space=vmem, size = 0x20000, scoped, tag = 'input window, operand 2, single buffered']
    #allocation7 [shape = 's32[1]{0}', space=sflag, size = 0x4, scoped, tag = 'scoped memory for tpu_custom_call.1']
    #allocation8 [shape = 'u8[131072]{0}', space=vmem, size = 0x20000, scoped, tag = 'output window, operand 0, single buffered']
    %9 = vsyncpa [#allocation4], 0
    %10 = vsyncpa [#allocation7], 0
    %11 = vsyncpa [#allocation5], 0
    // Predicated region
    $region2: #{tpu_custom_call.1} parent=1 // pred_check
      _
    $region3: #{tpu_custom_call.1} parent=1 // pred_check_branch
      %13 = sbr.rel (0) target = $region5
    $region4: #{tpu_custom_call.1} parent=1 // pred_region
      _
    $region5: #{tpu_custom_call.1} parent=1 // pred_fallthru
      _
    // Predicated region
    $region6: #{tpu_custom_call.1} parent=1 // pred_check
      _
    $region7: #{tpu_custom_call.1} parent=1 // pred_check_branch
      %15 = sbr.rel (0) target = $region9
    $region8: #{tpu_custom_call.1} parent=1 // pred_region
      %s17 = ssub.s32 4096, 4096
      %18 = vsyncadd [#allocation4], %s17
      %s19 = sshll.u32 [#allocation3], 4
      %s20 = int_to_ptr.vmem [resolvable:$true] %s19
      %25 = dma.hbm_to_vmem [thread:$0]  %s1, 4096, %s20, [#allocation4], 128, 128, 8
    $region9: #{tpu_custom_call.1} parent=1 // pred_fallthru
      _
    // Predicated region
    $region10: #{tpu_custom_call.1} parent=1 // pred_check
      _
    $region11: #{tpu_custom_call.1} parent=1 // pred_check_branch
      %27 = sbr.rel (0) target = $region13
    $region12: #{tpu_custom_call.1} parent=1 // pred_region
      %s29 = ssub.s32 4096, 4096
      %30 = vsyncadd [#allocation7], %s29
      %s31 = sshll.u32 [#allocation6], 4
      %s32 = int_to_ptr.vmem [resolvable:$true] %s31
      %37 = dma.hbm_to_vmem [thread:$0]  %s2, 4096, %s32, [#allocation7], 128, 128, 8
    $region13: #{tpu_custom_call.1} parent=1 // pred_fallthru
      _
    // Predicated region
    $region14: #{tpu_custom_call.1} parent=1 // pred_check
      _
    $region15: #{tpu_custom_call.1} parent=1 // pred_check_branch
      %39 = sbr.rel (0) target = $region17
    $region16: #{tpu_custom_call.1} parent=1 // pred_region
      %40 = dma.done [#allocation4], 4096
    $region17: #{tpu_custom_call.1} parent=1 // pred_fallthru
      _
    // Predicated region
    $region18: #{tpu_custom_call.1} parent=1 // pred_check
      _
    $region19: #{tpu_custom_call.1} parent=1 // pred_check_branch
      %42 = sbr.rel (0) target = $region21
    $region20: #{tpu_custom_call.1} parent=1 // pred_region
      %43 = dma.done [#allocation7], 4096
    $region21: #{tpu_custom_call.1} parent=1 // pred_fallthru
      _
    %v44 = vld [vmem:[#allocation3] sm:$0xff]
    %v45 = vld [vmem:[#allocation3 + $0x8] sm:$0xff]
    %v46 = vld [vmem:[#allocation3 + $0x10] sm:$0xff]
    %v47 = vld [vmem:[#allocation3 + $0x18] sm:$0xff]
    %v48 = vld [vmem:[#allocation3 + $0x20] sm:$0xff]
    %v49 = vld [vmem:[#allocation3 + $0x28] sm:$0xff]
    %v50 = vld [vmem:[#allocation3 + $0x30] sm:$0xff]
    %v51 = vld [vmem:[#allocation3 + $0x38] sm:$0xff]
    %v52 = vld [vmem:[#allocation3 + $0x40] sm:$0xff]
    %v53 = vld [vmem:[#allocation3 + $0x48] sm:$0xff]
    %v54 = vld [vmem:[#allocation3 + $0x50] sm:$0xff]
    %v55 = vld [vmem:[#allocation3 + $0x58] sm:$0xff]
    %v56 = vld [vmem:[#allocation3 + $0x60] sm:$0xff]
    %v57 = vld [vmem:[#allocation3 + $0x68] sm:$0xff]
    %v58 = vld [vmem:[#allocation3 + $0x70] sm:$0xff]
    %v59 = vld [vmem:[#allocation3 + $0x78] sm:$0xff]
    %v60 = vld [vmem:[#allocation3 + $0x80] sm:$0xff]
    %v61 = vld [vmem:[#allocation3 + $0x88] sm:$0xff]
    %v62 = vld [vmem:[#allocation3 + $0x90] sm:$0xff]
    %v63 = vld [vmem:[#allocation3 + $0x98] sm:$0xff]
    %v64 = vld [vmem:[#allocation3 + $0xa0] sm:$0xff]
    %v65 = vld [vmem:[#allocation3 + $0xa8] sm:$0xff]
    %v66 = vld [vmem:[#allocation3 + $0xb0] sm:$0xff]
    %v67 = vld [vmem:[#allocation3 + $0xb8] sm:$0xff]
    %v68 = vld [vmem:[#allocation3 + $0xc0] sm:$0xff]
    %v69 = vld [vmem:[#allocation3 + $0xc8] sm:$0xff]
    %v70 = vld [vmem:[#allocation3 + $0xd0] sm:$0xff]
    %v71 = vld [vmem:[#allocation3 + $0xd8] sm:$0xff]
    %v72 = vld [vmem:[#allocation3 + $0xe0] sm:$0xff]
    %v73 = vld [vmem:[#allocation3 + $0xe8] sm:$0xff]
    %v74 = vld [vmem:[#allocation3 + $0xf0] sm:$0xff]
    %v75 = vld [vmem:[#allocation3 + $0xf8] sm:$0xff]
    %v76 = vld [vmem:[#allocation6] sm:$0xff]
    %v77 = vld [vmem:[#allocation6 + $0x8] sm:$0xff]
    %v78 = vld [vmem:[#allocation6 + $0x10] sm:$0xff]
    %v79 = vld [vmem:[#allocation6 + $0x18] sm:$0xff]
    %v80 = vld [vmem:[#allocation6 + $0x20] sm:$0xff]
    %v81 = vld [vmem:[#allocation6 + $0x28] sm:$0xff]
    %v82 = vld [vmem:[#allocation6 + $0x30] sm:$0xff]
    %v83 = vld [vmem:[#allocation6 + $0x38] sm:$0xff]
    %v84 = vld [vmem:[#allocation6 + $0x40] sm:$0xff]
    %v85 = vld [vmem:[#allocation6 + $0x48] sm:$0xff]
    %v86 = vld [vmem:[#allocation6 + $0x50] sm:$0xff]
    %v87 = vld [vmem:[#allocation6 + $0x58] sm:$0xff]
    %v88 = vld [vmem:[#allocation6 + $0x60] sm:$0xff]
    %v89 = vld [vmem:[#allocation6 + $0x68] sm:$0xff]
    %v90 = vld [vmem:[#allocation6 + $0x70] sm:$0xff]
    %v91 = vld [vmem:[#allocation6 + $0x78] sm:$0xff]
    %v92 = vld [vmem:[#allocation6 + $0x80] sm:$0xff]
    %v93 = vld [vmem:[#allocation6 + $0x88] sm:$0xff]
    %v94 = vld [vmem:[#allocation6 + $0x90] sm:$0xff]
    %v95 = vld [vmem:[#allocation6 + $0x98] sm:$0xff]
    %v96 = vld [vmem:[#allocation6 + $0xa0] sm:$0xff]
    %v97 = vld [vmem:[#allocation6 + $0xa8] sm:$0xff]
    %v98 = vld [vmem:[#allocation6 + $0xb0] sm:$0xff]
    %v99 = vld [vmem:[#allocation6 + $0xb8] sm:$0xff]
    %v100 = vld [vmem:[#allocation6 + $0xc0] sm:$0xff]
    %v101 = vld [vmem:[#allocation6 + $0xc8] sm:$0xff]
    %v102 = vld [vmem:[#allocation6 + $0xd0] sm:$0xff]
    %v103 = vld [vmem:[#allocation6 + $0xd8] sm:$0xff]
    %v104 = vld [vmem:[#allocation6 + $0xe0] sm:$0xff]
    %v105 = vld [vmem:[#allocation6 + $0xe8] sm:$0xff]
    %v106 = vld [vmem:[#allocation6 + $0xf0] sm:$0xff]
    %v107 = vld [vmem:[#allocation6 + $0xf8] sm:$0xff]
    %v108 = vmul.f32 %v44, %v44
    %v109 = vmul.f32 %v45, %v45
    %v110 = vmul.f32 %v46, %v46
    %v111 = vmul.f32 %v47, %v47
    %v112 = vmul.f32 %v48, %v48
    %v113 = vmul.f32 %v49, %v49
    %v114 = vmul.f32 %v50, %v50
    %v115 = vmul.f32 %v51, %v51
    %v116 = vmul.f32 %v52, %v52
    %v117 = vmul.f32 %v53, %v53
    %v118 = vmul.f32 %v54, %v54
    %v119 = vmul.f32 %v55, %v55
    %v120 = vmul.f32 %v56, %v56
    %v121 = vmul.f32 %v57, %v57
    %v122 = vmul.f32 %v58, %v58
    %v123 = vmul.f32 %v59, %v59
    %v124 = vmul.f32 %v60, %v60
    %v125 = vmul.f32 %v61, %v61
    %v126 = vmul.f32 %v62, %v62
    %v127 = vmul.f32 %v63, %v63
    %v128 = vmul.f32 %v64, %v64
    %v129 = vmul.f32 %v65, %v65
    %v130 = vmul.f32 %v66, %v66
    %v131 = vmul.f32 %v67, %v67
    %v132 = vmul.f32 %v68, %v68
    %v133 = vmul.f32 %v69, %v69
    %v134 = vmul.f32 %v70, %v70
    %v135 = vmul.f32 %v71, %v71
    %v136 = vmul.f32 %v72, %v72
    %v137 = vmul.f32 %v73, %v73
    %v138 = vmul.f32 %v74, %v74
    %v139 = vmul.f32 %v75, %v75
    %140 = vadd.xlane.f32.xlu0 %v108
    %v141 = vpop.xlane.xlu0 %140
    %142 = vadd.xlane.f32.xlu0 %v109
    %v143 = vpop.xlane.xlu0 %142
    %144 = vadd.xlane.f32.xlu0 %v110
    %v145 = vpop.xlane.xlu0 %144
    %146 = vadd.xlane.f32.xlu0 %v111
    %v147 = vpop.xlane.xlu0 %146
    %148 = vadd.xlane.f32.xlu0 %v112
    %v149 = vpop.xlane.xlu0 %148
    %150 = vadd.xlane.f32.xlu0 %v113
    %v151 = vpop.xlane.xlu0 %150
    %152 = vadd.xlane.f32.xlu0 %v114
    %v153 = vpop.xlane.xlu0 %152
    %154 = vadd.xlane.f32.xlu0 %v115
    %v155 = vpop.xlane.xlu0 %154
    %156 = vadd.xlane.f32.xlu0 %v116
    %v157 = vpop.xlane.xlu0 %156
    %158 = vadd.xlane.f32.xlu0 %v117
    %v159 = vpop.xlane.xlu0 %158
    %160 = vadd.xlane.f32.xlu0 %v118
    %v161 = vpop.xlane.xlu0 %160
    %162 = vadd.xlane.f32.xlu0 %v119
    %v163 = vpop.xlane.xlu0 %162
    %164 = vadd.xlane.f32.xlu0 %v120
    %v165 = vpop.xlane.xlu0 %164
    %166 = vadd.xlane.f32.xlu0 %v121
    %v167 = vpop.xlane.xlu0 %166
    %168 = vadd.xlane.f32.xlu0 %v122
    %v169 = vpop.xlane.xlu0 %168
    %170 = vadd.xlane.f32.xlu0 %v123
    %v171 = vpop.xlane.xlu0 %170
    %172 = vadd.xlane.f32.xlu0 %v124
    %v173 = vpop.xlane.xlu0 %172
    %174 = vadd.xlane.f32.xlu0 %v125
    %v175 = vpop.xlane.xlu0 %174
    %176 = vadd.xlane.f32.xlu0 %v126
    %v177 = vpop.xlane.xlu0 %176
    %178 = vadd.xlane.f32.xlu0 %v127
    %v179 = vpop.xlane.xlu0 %178
    %180 = vadd.xlane.f32.xlu0 %v128
    %v181 = vpop.xlane.xlu0 %180
    %182 = vadd.xlane.f32.xlu0 %v129
    %v183 = vpop.xlane.xlu0 %182
    %184 = vadd.xlane.f32.xlu0 %v130
    %v185 = vpop.xlane.xlu0 %184
    %186 = vadd.xlane.f32.xlu0 %v131
    %v187 = vpop.xlane.xlu0 %186
    %188 = vadd.xlane.f32.xlu0 %v132
    %v189 = vpop.xlane.xlu0 %188
    %190 = vadd.xlane.f32.xlu0 %v133
    %v191 = vpop.xlane.xlu0 %190
    %192 = vadd.xlane.f32.xlu0 %v134
    %v193 = vpop.xlane.xlu0 %192
    %194 = vadd.xlane.f32.xlu0 %v135
    %v195 = vpop.xlane.xlu0 %194
    %196 = vadd.xlane.f32.xlu0 %v136
    %v197 = vpop.xlane.xlu0 %196
    %198 = vadd.xlane.f32.xlu0 %v137
    %v199 = vpop.xlane.xlu0 %198
    %200 = vadd.xlane.f32.xlu0 %v138
    %v201 = vpop.xlane.xlu0 %200
    %202 = vadd.xlane.f32.xlu0 %v139
    %v203 = vpop.xlane.xlu0 %202
    %v204 = vmul.f32 %v76, %v76
    %v205 = vmul.f32 %v77, %v77
    %v206 = vmul.f32 %v78, %v78
    %v207 = vmul.f32 %v79, %v79
    %v208 = vmul.f32 %v80, %v80
    %v209 = vmul.f32 %v81, %v81
    %v210 = vmul.f32 %v82, %v82
    %v211 = vmul.f32 %v83, %v83
    %v212 = vmul.f32 %v84, %v84
    %v213 = vmul.f32 %v85, %v85
    %v214 = vmul.f32 %v86, %v86
    %v215 = vmul.f32 %v87, %v87
    %v216 = vmul.f32 %v88, %v88
    %v217 = vmul.f32 %v89, %v89
    %v218 = vmul.f32 %v90, %v90
    %v219 = vmul.f32 %v91, %v91
    %v220 = vmul.f32 %v92, %v92
    %v221 = vmul.f32 %v93, %v93
    %v222 = vmul.f32 %v94, %v94
    %v223 = vmul.f32 %v95, %v95
    %v224 = vmul.f32 %v96, %v96
    %v225 = vmul.f32 %v97, %v97
    %v226 = vmul.f32 %v98, %v98
    %v227 = vmul.f32 %v99, %v99
    %v228 = vmul.f32 %v100, %v100
    %v229 = vmul.f32 %v101, %v101
    %v230 = vmul.f32 %v102, %v102
    %v231 = vmul.f32 %v103, %v103
    %v232 = vmul.f32 %v104, %v104
    %v233 = vmul.f32 %v105, %v105
    %v234 = vmul.f32 %v106, %v106
    %v235 = vmul.f32 %v107, %v107
    %236 = vadd.xlane.f32.xlu0 %v204
    %v237 = vpop.xlane.xlu0 %236
    %238 = vadd.xlane.f32.xlu0 %v205
    %v239 = vpop.xlane.xlu0 %238
    %240 = vadd.xlane.f32.xlu0 %v206
    %v241 = vpop.xlane.xlu0 %240
    %242 = vadd.xlane.f32.xlu0 %v207
    %v243 = vpop.xlane.xlu0 %242
    %244 = vadd.xlane.f32.xlu0 %v208
    %v245 = vpop.xlane.xlu0 %244
    %246 = vadd.xlane.f32.xlu0 %v209
    %v247 = vpop.xlane.xlu0 %246
    %248 = vadd.xlane.f32.xlu0 %v210
    %v249 = vpop.xlane.xlu0 %248
    %250 = vadd.xlane.f32.xlu0 %v211
    %v251 = vpop.xlane.xlu0 %250
    %252 = vadd.xlane.f32.xlu0 %v212
    %v253 = vpop.xlane.xlu0 %252
    %254 = vadd.xlane.f32.xlu0 %v213
    %v255 = vpop.xlane.xlu0 %254
    %256 = vadd.xlane.f32.xlu0 %v214
    %v257 = vpop.xlane.xlu0 %256
    %258 = vadd.xlane.f32.xlu0 %v215
    %v259 = vpop.xlane.xlu0 %258
    %260 = vadd.xlane.f32.xlu0 %v216
    %v261 = vpop.xlane.xlu0 %260
    %262 = vadd.xlane.f32.xlu0 %v217
    %v263 = vpop.xlane.xlu0 %262
    %264 = vadd.xlane.f32.xlu0 %v218
    %v265 = vpop.xlane.xlu0 %264
    %266 = vadd.xlane.f32.xlu0 %v219
    %v267 = vpop.xlane.xlu0 %266
    %268 = vadd.xlane.f32.xlu0 %v220
    %v269 = vpop.xlane.xlu0 %268
    %270 = vadd.xlane.f32.xlu0 %v221
    %v271 = vpop.xlane.xlu0 %270
    %272 = vadd.xlane.f32.xlu0 %v222
    %v273 = vpop.xlane.xlu0 %272
    %274 = vadd.xlane.f32.xlu0 %v223
    %v275 = vpop.xlane.xlu0 %274
    %276 = vadd.xlane.f32.xlu0 %v224
    %v277 = vpop.xlane.xlu0 %276
    %278 = vadd.xlane.f32.xlu0 %v225
    %v279 = vpop.xlane.xlu0 %278
    %280 = vadd.xlane.f32.xlu0 %v226
    %v281 = vpop.xlane.xlu0 %280
    %282 = vadd.xlane.f32.xlu0 %v227
    %v283 = vpop.xlane.xlu0 %282
    %284 = vadd.xlane.f32.xlu0 %v228
    %v285 = vpop.xlane.xlu0 %284
    %286 = vadd.xlane.f32.xlu0 %v229
    %v287 = vpop.xlane.xlu0 %286
    %288 = vadd.xlane.f32.xlu0 %v230
    %v289 = vpop.xlane.xlu0 %288
    %290 = vadd.xlane.f32.xlu0 %v231
    %v291 = vpop.xlane.xlu0 %290
    %292 = vadd.xlane.f32.xlu0 %v232
    %v293 = vpop.xlane.xlu0 %292
    %294 = vadd.xlane.f32.xlu0 %v233
    %v295 = vpop.xlane.xlu0 %294
    %296 = vadd.xlane.f32.xlu0 %v234
    %v297 = vpop.xlane.xlu0 %296
    %298 = vadd.xlane.f32.xlu0 %v235
    %v299 = vpop.xlane.xlu0 %298
    %v300 = vrsqrt.pop %v141
    %v301 = vmul.f32 %v141, %v300
    %vm302 = vcmp.eq.f32.partialorder %v141, inf
    %v303 = vsel %vm302, %v141, %v301
    %vm304 = vcmp.eq.f32.partialorder %v141, 0.0
    %v305 = vand.u32 %v141, 2147483648
    %v306 = vsel %vm304, %v305, %v303
    %v307 = vrsqrt.pop %v143
    %v308 = vmul.f32 %v143, %v307
    %vm309 = vcmp.eq.f32.partialorder %v143, inf
    %v310 = vsel %vm309, %v143, %v308
    %vm311 = vcmp.eq.f32.partialorder %v143, 0.0
    %v312 = vand.u32 %v143, 2147483648
    %v313 = vsel %vm311, %v312, %v310
    %v314 = vrsqrt.pop %v145
    %v315 = vmul.f32 %v145, %v314
    %vm316 = vcmp.eq.f32.partialorder %v145, inf
    %v317 = vsel %vm316, %v145, %v315
    %vm318 = vcmp.eq.f32.partialorder %v145, 0.0
    %v319 = vand.u32 %v145, 2147483648
    %v320 = vsel %vm318, %v319, %v317
    %v321 = vrsqrt.pop %v147
    %v322 = vmul.f32 %v147, %v321
    %vm323 = vcmp.eq.f32.partialorder %v147, inf
    %v324 = vsel %vm323, %v147, %v322
    %vm325 = vcmp.eq.f32.partialorder %v147, 0.0
    %v326 = vand.u32 %v147, 2147483648
    %v327 = vsel %vm325, %v326, %v324
    %v328 = vrsqrt.pop %v149
    %v329 = vmul.f32 %v149, %v328
    %vm330 = vcmp.eq.f32.partialorder %v149, inf
    %v331 = vsel %vm330, %v149, %v329
    %vm332 = vcmp.eq.f32.partialorder %v149, 0.0
    %v333 = vand.u32 %v149, 2147483648
    %v334 = vsel %vm332, %v333, %v331
    %v335 = vrsqrt.pop %v151
    %v336 = vmul.f32 %v151, %v335
    %vm337 = vcmp.eq.f32.partialorder %v151, inf
    %v338 = vsel %vm337, %v151, %v336
    %vm339 = vcmp.eq.f32.partialorder %v151, 0.0
    %v340 = vand.u32 %v151, 2147483648
    %v341 = vsel %vm339, %v340, %v338
    %v342 = vrsqrt.pop %v153
    %v343 = vmul.f32 %v153, %v342
    %vm344 = vcmp.eq.f32.partialorder %v153, inf
    %v345 = vsel %vm344, %v153, %v343
    %vm346 = vcmp.eq.f32.partialorder %v153, 0.0
    %v347 = vand.u32 %v153, 2147483648
    %v348 = vsel %vm346, %v347, %v345
    %v349 = vrsqrt.pop %v155
    %v350 = vmul.f32 %v155, %v349
    %vm351 = vcmp.eq.f32.partialorder %v155, inf
    %v352 = vsel %vm351, %v155, %v350
    %vm353 = vcmp.eq.f32.partialorder %v155, 0.0
    %v354 = vand.u32 %v155, 2147483648
    %v355 = vsel %vm353, %v354, %v352
    %v356 = vrsqrt.pop %v157
    %v357 = vmul.f32 %v157, %v356
    %vm358 = vcmp.eq.f32.partialorder %v157, inf
    %v359 = vsel %vm358, %v157, %v357
    %vm360 = vcmp.eq.f32.partialorder %v157, 0.0
    %v361 = vand.u32 %v157, 2147483648
    %v362 = vsel %vm360, %v361, %v359
    %v363 = vrsqrt.pop %v159
    %v364 = vmul.f32 %v159, %v363
    %vm365 = vcmp.eq.f32.partialorder %v159, inf
    %v366 = vsel %vm365, %v159, %v364
    %vm367 = vcmp.eq.f32.partialorder %v159, 0.0
    %v368 = vand.u32 %v159, 2147483648
    %v369 = vsel %vm367, %v368, %v366
    %v370 = vrsqrt.pop %v161
    %v371 = vmul.f32 %v161, %v370
    %vm372 = vcmp.eq.f32.partialorder %v161, inf
    %v373 = vsel %vm372, %v161, %v371
    %vm374 = vcmp.eq.f32.partialorder %v161, 0.0
    %v375 = vand.u32 %v161, 2147483648
    %v376 = vsel %vm374, %v375, %v373
    %v377 = vrsqrt.pop %v163
    %v378 = vmul.f32 %v163, %v377
    %vm379 = vcmp.eq.f32.partialorder %v163, inf
    %v380 = vsel %vm379, %v163, %v378
    %vm381 = vcmp.eq.f32.partialorder %v163, 0.0
    %v382 = vand.u32 %v163, 2147483648
    %v383 = vsel %vm381, %v382, %v380
    %v384 = vrsqrt.pop %v165
    %v385 = vmul.f32 %v165, %v384
    %vm386 = vcmp.eq.f32.partialorder %v165, inf
    %v387 = vsel %vm386, %v165, %v385
    %vm388 = vcmp.eq.f32.partialorder %v165, 0.0
    %v389 = vand.u32 %v165, 2147483648
    %v390 = vsel %vm388, %v389, %v387
    %v391 = vrsqrt.pop %v167
    %v392 = vmul.f32 %v167, %v391
    %vm393 = vcmp.eq.f32.partialorder %v167, inf
    %v394 = vsel %vm393, %v167, %v392
    %vm395 = vcmp.eq.f32.partialorder %v167, 0.0
    %v396 = vand.u32 %v167, 2147483648
    %v397 = vsel %vm395, %v396, %v394
    %v398 = vrsqrt.pop %v169
    %v399 = vmul.f32 %v169, %v398
    %vm400 = vcmp.eq.f32.partialorder %v169, inf
    %v401 = vsel %vm400, %v169, %v399
    %vm402 = vcmp.eq.f32.partialorder %v169, 0.0
    %v403 = vand.u32 %v169, 2147483648
    %v404 = vsel %vm402, %v403, %v401
    %v405 = vrsqrt.pop %v171
    %v406 = vmul.f32 %v171, %v405
    %vm407 = vcmp.eq.f32.partialorder %v171, inf
    %v408 = vsel %vm407, %v171, %v406
    %vm409 = vcmp.eq.f32.partialorder %v171, 0.0
    %v410 = vand.u32 %v171, 2147483648
    %v411 = vsel %vm409, %v410, %v408
    %v412 = vrsqrt.pop %v173
    %v413 = vmul.f32 %v173, %v412
    %vm414 = vcmp.eq.f32.partialorder %v173, inf
    %v415 = vsel %vm414, %v173, %v413
    %vm416 = vcmp.eq.f32.partialorder %v173, 0.0
    %v417 = vand.u32 %v173, 2147483648
    %v418 = vsel %vm416, %v417, %v415
    %v419 = vrsqrt.pop %v175
    %v420 = vmul.f32 %v175, %v419
    %vm421 = vcmp.eq.f32.partialorder %v175, inf
    %v422 = vsel %vm421, %v175, %v420
    %vm423 = vcmp.eq.f32.partialorder %v175, 0.0
    %v424 = vand.u32 %v175, 2147483648
    %v425 = vsel %vm423, %v424, %v422
    %v426 = vrsqrt.pop %v177
    %v427 = vmul.f32 %v177, %v426
    %vm428 = vcmp.eq.f32.partialorder %v177, inf
    %v429 = vsel %vm428, %v177, %v427
    %vm430 = vcmp.eq.f32.partialorder %v177, 0.0
    %v431 = vand.u32 %v177, 2147483648
    %v432 = vsel %vm430, %v431, %v429
    %v433 = vrsqrt.pop %v179
    %v434 = vmul.f32 %v179, %v433
    %vm435 = vcmp.eq.f32.partialorder %v179, inf
    %v436 = vsel %vm435, %v179, %v434
    %vm437 = vcmp.eq.f32.partialorder %v179, 0.0
    %v438 = vand.u32 %v179, 2147483648
    %v439 = vsel %vm437, %v438, %v436
    %v440 = vrsqrt.pop %v181
    %v441 = vmul.f32 %v181, %v440
    %vm442 = vcmp.eq.f32.partialorder %v181, inf
    %v443 = vsel %vm442, %v181, %v441
    %vm444 = vcmp.eq.f32.partialorder %v181, 0.0
    %v445 = vand.u32 %v181, 2147483648
    %v446 = vsel %vm444, %v445, %v443
    %v447 = vrsqrt.pop %v183
    %v448 = vmul.f32 %v183, %v447
    %vm449 = vcmp.eq.f32.partialorder %v183, inf
    %v450 = vsel %vm449, %v183, %v448
    %vm451 = vcmp.eq.f32.partialorder %v183, 0.0
    %v452 = vand.u32 %v183, 2147483648
    %v453 = vsel %vm451, %v452, %v450
    %v454 = vrsqrt.pop %v185
    %v455 = vmul.f32 %v185, %v454
    %vm456 = vcmp.eq.f32.partialorder %v185, inf
    %v457 = vsel %vm456, %v185, %v455
    %vm458 = vcmp.eq.f32.partialorder %v185, 0.0
    %v459 = vand.u32 %v185, 2147483648
    %v460 = vsel %vm458, %v459, %v457
    %v461 = vrsqrt.pop %v187
    %v462 = vmul.f32 %v187, %v461
    %vm463 = vcmp.eq.f32.partialorder %v187, inf
    %v464 = vsel %vm463, %v187, %v462
    %vm465 = vcmp.eq.f32.partialorder %v187, 0.0
    %v466 = vand.u32 %v187, 2147483648
    %v467 = vsel %vm465, %v466, %v464
    %v468 = vrsqrt.pop %v189
    %v469 = vmul.f32 %v189, %v468
    %vm470 = vcmp.eq.f32.partialorder %v189, inf
    %v471 = vsel %vm470, %v189, %v469
    %vm472 = vcmp.eq.f32.partialorder %v189, 0.0
    %v473 = vand.u32 %v189, 2147483648
    %v474 = vsel %vm472, %v473, %v471
    %v475 = vrsqrt.pop %v191
    %v476 = vmul.f32 %v191, %v475
    %vm477 = vcmp.eq.f32.partialorder %v191, inf
    %v478 = vsel %vm477, %v191, %v476
    %vm479 = vcmp.eq.f32.partialorder %v191, 0.0
    %v480 = vand.u32 %v191, 2147483648
    %v481 = vsel %vm479, %v480, %v478
    %v482 = vrsqrt.pop %v193
    %v483 = vmul.f32 %v193, %v482
    %vm484 = vcmp.eq.f32.partialorder %v193, inf
    %v485 = vsel %vm484, %v193, %v483
    %vm486 = vcmp.eq.f32.partialorder %v193, 0.0
    %v487 = vand.u32 %v193, 2147483648
    %v488 = vsel %vm486, %v487, %v485
    %v489 = vrsqrt.pop %v195
    %v490 = vmul.f32 %v195, %v489
    %vm491 = vcmp.eq.f32.partialorder %v195, inf
    %v492 = vsel %vm491, %v195, %v490
    %vm493 = vcmp.eq.f32.partialorder %v195, 0.0
    %v494 = vand.u32 %v195, 2147483648
    %v495 = vsel %vm493, %v494, %v492
    %v496 = vrsqrt.pop %v197
    %v497 = vmul.f32 %v197, %v496
    %vm498 = vcmp.eq.f32.partialorder %v197, inf
    %v499 = vsel %vm498, %v197, %v497
    %vm500 = vcmp.eq.f32.partialorder %v197, 0.0
    %v501 = vand.u32 %v197, 2147483648
    %v502 = vsel %vm500, %v501, %v499
    %v503 = vrsqrt.pop %v199
    %v504 = vmul.f32 %v199, %v503
    %vm505 = vcmp.eq.f32.partialorder %v199, inf
    %v506 = vsel %vm505, %v199, %v504
    %vm507 = vcmp.eq.f32.partialorder %v199, 0.0
    %v508 = vand.u32 %v199, 2147483648
    %v509 = vsel %vm507, %v508, %v506
    %v510 = vrsqrt.pop %v201
    %v511 = vmul.f32 %v201, %v510
    %vm512 = vcmp.eq.f32.partialorder %v201, inf
    %v513 = vsel %vm512, %v201, %v511
    %vm514 = vcmp.eq.f32.partialorder %v201, 0.0
    %v515 = vand.u32 %v201, 2147483648
    %v516 = vsel %vm514, %v515, %v513
    %v517 = vrsqrt.pop %v203
    %v518 = vmul.f32 %v203, %v517
    %vm519 = vcmp.eq.f32.partialorder %v203, inf
    %v520 = vsel %vm519, %v203, %v518
    %vm521 = vcmp.eq.f32.partialorder %v203, 0.0
    %v522 = vand.u32 %v203, 2147483648
    %v523 = vsel %vm521, %v522, %v520
    %v524 = vmax.f32 %v237, 1e-24
    %v525 = vmax.f32 %v239, 1e-24
    %v526 = vmax.f32 %v241, 1e-24
    %v527 = vmax.f32 %v243, 1e-24
    %v528 = vmax.f32 %v245, 1e-24
    %v529 = vmax.f32 %v247, 1e-24
    %v530 = vmax.f32 %v249, 1e-24
    %v531 = vmax.f32 %v251, 1e-24
    %v532 = vmax.f32 %v253, 1e-24
    %v533 = vmax.f32 %v255, 1e-24
    %v534 = vmax.f32 %v257, 1e-24
    %v535 = vmax.f32 %v259, 1e-24
    %v536 = vmax.f32 %v261, 1e-24
    %v537 = vmax.f32 %v263, 1e-24
    %v538 = vmax.f32 %v265, 1e-24
    %v539 = vmax.f32 %v267, 1e-24
    %v540 = vmax.f32 %v269, 1e-24
    %v541 = vmax.f32 %v271, 1e-24
    %v542 = vmax.f32 %v273, 1e-24
    %v543 = vmax.f32 %v275, 1e-24
    %v544 = vmax.f32 %v277, 1e-24
    %v545 = vmax.f32 %v279, 1e-24
    %v546 = vmax.f32 %v281, 1e-24
    %v547 = vmax.f32 %v283, 1e-24
    %v548 = vmax.f32 %v285, 1e-24
    %v549 = vmax.f32 %v287, 1e-24
    %v550 = vmax.f32 %v289, 1e-24
    %v551 = vmax.f32 %v291, 1e-24
    %v552 = vmax.f32 %v293, 1e-24
    %v553 = vmax.f32 %v295, 1e-24
    %v554 = vmax.f32 %v297, 1e-24
    %v555 = vmax.f32 %v299, 1e-24
    %v556 = vrsqrt.pop %v524
    %v557 = vrsqrt.pop %v525
    %v558 = vrsqrt.pop %v526
    %v559 = vrsqrt.pop %v527
    %v560 = vrsqrt.pop %v528
    %v561 = vrsqrt.pop %v529
    %v562 = vrsqrt.pop %v530
    %v563 = vrsqrt.pop %v531
    %v564 = vrsqrt.pop %v532
    %v565 = vrsqrt.pop %v533
    %v566 = vrsqrt.pop %v534
    %v567 = vrsqrt.pop %v535
    %v568 = vrsqrt.pop %v536
    %v569 = vrsqrt.pop %v537
    %v570 = vrsqrt.pop %v538
    %v571 = vrsqrt.pop %v539
    %v572 = vrsqrt.pop %v540
    %v573 = vrsqrt.pop %v541
    %v574 = vrsqrt.pop %v542
    %v575 = vrsqrt.pop %v543
    %v576 = vrsqrt.pop %v544
    %v577 = vrsqrt.pop %v545
    %v578 = vrsqrt.pop %v546
    %v579 = vrsqrt.pop %v547
    %v580 = vrsqrt.pop %v548
    %v581 = vrsqrt.pop %v549
    %v582 = vrsqrt.pop %v550
    %v583 = vrsqrt.pop %v551
    %v584 = vrsqrt.pop %v552
    %v585 = vrsqrt.pop %v553
    %v586 = vrsqrt.pop %v554
    %v587 = vrsqrt.pop %v555
    %v588 = vmul.f32 %v306, %v556
    %v589 = vmul.f32 %v313, %v557
    %v590 = vmul.f32 %v320, %v558
    %v591 = vmul.f32 %v327, %v559
    %v592 = vmul.f32 %v334, %v560
    %v593 = vmul.f32 %v341, %v561
    %v594 = vmul.f32 %v348, %v562
    %v595 = vmul.f32 %v355, %v563
    %v596 = vmul.f32 %v362, %v564
    %v597 = vmul.f32 %v369, %v565
    %v598 = vmul.f32 %v376, %v566
    %v599 = vmul.f32 %v383, %v567
    %v600 = vmul.f32 %v390, %v568
    %v601 = vmul.f32 %v397, %v569
    %v602 = vmul.f32 %v404, %v570
    %v603 = vmul.f32 %v411, %v571
    %v604 = vmul.f32 %v418, %v572
    %v605 = vmul.f32 %v425, %v573
    %v606 = vmul.f32 %v432, %v574
    %v607 = vmul.f32 %v439, %v575
    %v608 = vmul.f32 %v446, %v576
    %v609 = vmul.f32 %v453, %v577
    %v610 = vmul.f32 %v460, %v578
    %v611 = vmul.f32 %v467, %v579
    %v612 = vmul.f32 %v474, %v580
    %v613 = vmul.f32 %v481, %v581
    %v614 = vmul.f32 %v488, %v582
    %v615 = vmul.f32 %v495, %v583
    %v616 = vmul.f32 %v502, %v584
    %v617 = vmul.f32 %v509, %v585
    %v618 = vmul.f32 %v516, %v586
    %v619 = vmul.f32 %v523, %v587
    %s620 = sld [smem:[#allocation2]]
    %v621 = vstv %s620
    %v622 = vmul.f32 %v588, %v621
    %v623 = vmul.f32 %v589, %v621
    %v624 = vmul.f32 %v590, %v621
    %v625 = vmul.f32 %v591, %v621
    %v626 = vmul.f32 %v592, %v621
    %v627 = vmul.f32 %v593, %v621
    %v628 = vmul.f32 %v594, %v621
    %v629 = vmul.f32 %v595, %v621
    %v630 = vmul.f32 %v596, %v621
    %v631 = vmul.f32 %v597, %v621
    %v632 = vmul.f32 %v598, %v621
    %v633 = vmul.f32 %v599, %v621
    %v634 = vmul.f32 %v600, %v621
    %v635 = vmul.f32 %v601, %v621
    %v636 = vmul.f32 %v602, %v621
    %v637 = vmul.f32 %v603, %v621
    %v638 = vmul.f32 %v604, %v621
    %v639 = vmul.f32 %v605, %v621
    %v640 = vmul.f32 %v606, %v621
    %v641 = vmul.f32 %v607, %v621
    %v642 = vmul.f32 %v608, %v621
    %v643 = vmul.f32 %v609, %v621
    %v644 = vmul.f32 %v610, %v621
    %v645 = vmul.f32 %v611, %v621
    %v646 = vmul.f32 %v612, %v621
    %v647 = vmul.f32 %v613, %v621
    %v648 = vmul.f32 %v614, %v621
    %v649 = vmul.f32 %v615, %v621
    %v650 = vmul.f32 %v616, %v621
    %v651 = vmul.f32 %v617, %v621
    %v652 = vmul.f32 %v618, %v621
    %v653 = vmul.f32 %v619, %v621
    %v654 = vmul.f32 %v76, %v622
    %v655 = vmul.f32 %v77, %v623
    %v656 = vmul.f32 %v78, %v624
    %v657 = vmul.f32 %v79, %v625
    %v658 = vmul.f32 %v80, %v626
    %v659 = vmul.f32 %v81, %v627
    %v660 = vmul.f32 %v82, %v628
    %v661 = vmul.f32 %v83, %v629
    %v662 = vmul.f32 %v84, %v630
    %v663 = vmul.f32 %v85, %v631
    %v664 = vmul.f32 %v86, %v632
    %v665 = vmul.f32 %v87, %v633
    %v666 = vmul.f32 %v88, %v634
    %v667 = vmul.f32 %v89, %v635
    %v668 = vmul.f32 %v90, %v636
    %v669 = vmul.f32 %v91, %v637
    %v670 = vmul.f32 %v92, %v638
    %v671 = vmul.f32 %v93, %v639
    %v672 = vmul.f32 %v94, %v640
    %v673 = vmul.f32 %v95, %v641
    %v674 = vmul.f32 %v96, %v642
    %v675 = vmul.f32 %v97, %v643
    %v676 = vmul.f32 %v98, %v644
    %v677 = vmul.f32 %v99, %v645
    %v678 = vmul.f32 %v100, %v646
    %v679 = vmul.f32 %v101, %v647
    %v680 = vmul.f32 %v102, %v648
    %v681 = vmul.f32 %v103, %v649
    %v682 = vmul.f32 %v104, %v650
    %v683 = vmul.f32 %v105, %v651
    %v684 = vmul.f32 %v106, %v652
    %v685 = vmul.f32 %v107, %v653
    %686 = vst [vmem:[#allocation8] sm:$0xff] %v654
    %687 = vst [vmem:[#allocation8 + $0x8] sm:$0xff] %v655
    %688 = vst [vmem:[#allocation8 + $0x10] sm:$0xff] %v656
    %689 = vst [vmem:[#allocation8 + $0x18] sm:$0xff] %v657
    %690 = vst [vmem:[#allocation8 + $0x20] sm:$0xff] %v658
    %691 = vst [vmem:[#allocation8 + $0x28] sm:$0xff] %v659
    %692 = vst [vmem:[#allocation8 + $0x30] sm:$0xff] %v660
    %693 = vst [vmem:[#allocation8 + $0x38] sm:$0xff] %v661
    %694 = vst [vmem:[#allocation8 + $0x40] sm:$0xff] %v662
    %695 = vst [vmem:[#allocation8 + $0x48] sm:$0xff] %v663
    %696 = vst [vmem:[#allocation8 + $0x50] sm:$0xff] %v664
    %697 = vst [vmem:[#allocation8 + $0x58] sm:$0xff] %v665
    %698 = vst [vmem:[#allocation8 + $0x60] sm:$0xff] %v666
    %699 = vst [vmem:[#allocation8 + $0x68] sm:$0xff] %v667
    %700 = vst [vmem:[#allocation8 + $0x70] sm:$0xff] %v668
    %701 = vst [vmem:[#allocation8 + $0x78] sm:$0xff] %v669
    %702 = vst [vmem:[#allocation8 + $0x80] sm:$0xff] %v670
    %703 = vst [vmem:[#allocation8 + $0x88] sm:$0xff] %v671
    %704 = vst [vmem:[#allocation8 + $0x90] sm:$0xff] %v672
    %705 = vst [vmem:[#allocation8 + $0x98] sm:$0xff] %v673
    %706 = vst [vmem:[#allocation8 + $0xa0] sm:$0xff] %v674
    %707 = vst [vmem:[#allocation8 + $0xa8] sm:$0xff] %v675
    %708 = vst [vmem:[#allocation8 + $0xb0] sm:$0xff] %v676
    %709 = vst [vmem:[#allocation8 + $0xb8] sm:$0xff] %v677
    %710 = vst [vmem:[#allocation8 + $0xc0] sm:$0xff] %v678
    %711 = vst [vmem:[#allocation8 + $0xc8] sm:$0xff] %v679
    %712 = vst [vmem:[#allocation8 + $0xd0] sm:$0xff] %v680
    %713 = vst [vmem:[#allocation8 + $0xd8] sm:$0xff] %v681
    %714 = vst [vmem:[#allocation8 + $0xe0] sm:$0xff] %v682
    %715 = vst [vmem:[#allocation8 + $0xe8] sm:$0xff] %v683
    %716 = vst [vmem:[#allocation8 + $0xf0] sm:$0xff] %v684
    %717 = vst [vmem:[#allocation8 + $0xf8] sm:$0xff] %v685
    // Predicated region
    $region22: #{tpu_custom_call.1} parent=1 // pred_check
      _
    $region23: #{tpu_custom_call.1} parent=1 // pred_check_branch
      %719 = sbr.rel (0) target = $region25
    $region24: #{tpu_custom_call.1} parent=1 // pred_region
      %s721 = ssub.s32 4096, 4096
      %722 = vsyncadd [#allocation5], %s721
      %s723 = sshll.u32 [#allocation8], 4
      %s724 = int_to_ptr.vmem [resolvable:$true] %s723
      %729 = dma.vmem_to_hbm [thread:$0]  %s724, 4096, %s3, [#allocation5], 128, 128, 8
    $region25: #{tpu_custom_call.1} parent=1 // pred_fallthru
      _
    // Predicated region
    $region26: #{tpu_custom_call.1} parent=1 // pred_check
      _
    $region27: #{tpu_custom_call.1} parent=1 // pred_check_branch
      %731 = sbr.rel (0) target = $region29
    $region28: #{tpu_custom_call.1} parent=1 // pred_region
      %732 = dma.done [#allocation5], 4096
    $region29: #{tpu_custom_call.1} parent=1 // pred_fallthru
      _
    %733 = vsyncpa [#allocation4], 1
    %734 = vsyncpa [#allocation7], 1
    %735 = vsyncpa [#allocation5], 1

</llo_original>
